<compile_context>
chip_gen: v7x
topology: tpu7x:2x2x1
jax: 0.10.0
libtpu: 0.0.40
codegen_flags: <defaults>
</compile_context>

<pallas_src>
import jax
import jax.numpy as jnp
from jax.experimental import pallas as pl
from jax.experimental.pallas import tpu as pltpu

IN = 1
HIDDEN = 100          # ll = hidden_size * 10
OUT = 10
HIDDEN_PAD = 128
OUT_PAD = 128
BN_EPS = 1e-5
NEG_BIG = -1e30       # bias for padded logit lanes -> exp underflows to exactly 0


def _sigmoid(x):
    # EUP tanh form of the logistic; mathematically identical to 1/(1+exp(-x)).
    return 0.5 * jnp.tanh(0.5 * x) + 0.5


def regression_kernel(x_ref, w1_ref, wb_ref, w2_ref, vec_ref, o_ref):
    b1 = vec_ref[0:1, :]        # (1, 128)
    bb = vec_ref[1:2, :]
    bn_scale = vec_ref[2:3, :]
    bn_shift = vec_ref[3:4, :]
    b2 = vec_ref[4:5, :]        # padded lanes hold NEG_BIG

    # Linear(1, 100): K=1 contraction -> rank broadcast on the VPU (no MXU).
    h = x_ref[...] * w1_ref[...] + b1                       # (tb,1)*(1,128)+(1,128)

    # Two ResBlocks sharing the SAME weights: h = Linear(sigmoid(h)).
    wb = wb_ref[...]
    for _ in range(2):
        h = _sigmoid(h)
        h = jnp.dot(h, wb, preferred_element_type=jnp.float32) + bb

    # BatchNorm1d (eval mode) folded to scale/shift, then Sigmoid (+ identity Dropout).
    h = _sigmoid(h * bn_scale + bn_shift)

    # Linear(100, 10), output lanes padded to 128 (zero weight cols, -1e30 bias).
    logits = jnp.dot(h, w2_ref[...], preferred_element_type=jnp.float32) + b2

    # Softmax over last dim; padded lanes contribute exp(-huge) == 0.
    m = jnp.max(logits, axis=-1, keepdims=True)
    e = jnp.exp(logits - m)
    o_ref[...] = e * pl.reciprocal(jnp.sum(e, axis=-1, keepdims=True), approx=False)


def _pad_and_fold_params(params):
    """Pad to 128 lanes and fold BatchNorm into scale/shift (wrapper-side, one-time)."""
    w1, b1, wb, bb, gamma, beta, mean, var, w2, b2 = params

    w1p = jnp.zeros((IN, HIDDEN_PAD), jnp.float32).at[:, :HIDDEN].set(
        w1.reshape(IN, HIDDEN))
    wbp = jnp.zeros((HIDDEN_PAD, HIDDEN_PAD), jnp.float32).at[:HIDDEN, :HIDDEN].set(wb)
    w2p = jnp.zeros((HIDDEN_PAD, OUT_PAD), jnp.float32).at[:HIDDEN, :OUT].set(w2)

    bn_scale = (gamma * jax.lax.rsqrt(var + BN_EPS)).reshape(-1)
    bn_shift = (beta - mean.reshape(1, -1) * bn_scale).reshape(-1)

    vecs = jnp.zeros((8, HIDDEN_PAD), jnp.float32)
    vecs = vecs.at[0, :HIDDEN].set(b1.reshape(-1))
    vecs = vecs.at[1, :HIDDEN].set(bb.reshape(-1))
    vecs = vecs.at[2, :HIDDEN].set(bn_scale)
    vecs = vecs.at[3, :HIDDEN].set(bn_shift)
    vecs = vecs.at[4, :].set(
        jnp.full((OUT_PAD,), NEG_BIG, jnp.float32).at[:OUT].set(b2.reshape(-1)))

    return w1p, wbp, w2p, vecs


def _default_tb(B):
    # multiple of 8 (f32 sublane rule), ~512-1024 preferred, must divide B
    for cand in (1024, 512, 256, 128, 64, 32, 16, 8):
        if B % cand == 0:
            return cand
    return B  # fall back to a single full-array block


def regression_model(x, params, *, tb=None):
    B = x.shape[0]
    tb = _default_tb(B) if tb is None else tb
    assert B % tb == 0
    assert tb % 8 == 0 or tb == B, "tile must be a multiple of 8 (f32) or the full batch"

    w1p, wbp, w2p, vecs = _pad_and_fold_params(params)

    full = lambda shape: pl.BlockSpec(shape, lambda i: (0, 0))

    out_padded = pl.pallas_call(
        regression_kernel,
        out_shape=jax.ShapeDtypeStruct((B, OUT_PAD), jnp.float32),
        grid_spec=pltpu.PrefetchScalarGridSpec(
            num_scalar_prefetch=0,
            grid=(B // tb,),
            in_specs=[
                pl.BlockSpec((tb, IN), lambda i: (i, 0)),     # x tile
                full((IN, HIDDEN_PAD)),                       # w1 (padded)
                full((HIDDEN_PAD, HIDDEN_PAD)),               # shared block weight
                full((HIDDEN_PAD, OUT_PAD)),                  # output weight
                full((8, HIDDEN_PAD)),                        # stacked bias/BN vectors
            ],
            out_specs=pl.BlockSpec((tb, OUT_PAD), lambda i: (i, 0)),
        ),
        compiler_params=pltpu.CompilerParams(
            dimension_semantics=("parallel",)),
    )(x, w1p, wbp, w2p, vecs)

    return out_padded[:, :OUT]


def init_params(key):
    ks = jax.random.split(key, 6)

    def linear_init(kw, kb, fan_in, fan_out):
        # mimic PyTorch's uniform(-1/sqrt(fan_in), 1/sqrt(fan_in))
        bound = 1.0 / (fan_in ** 0.5)
        w = jax.random.uniform(kw, (fan_in, fan_out), jnp.float32, -bound, bound)
        b = jax.random.uniform(kb, (1, fan_out), jnp.float32, -bound, bound)
        return w, b

    w1, b1 = linear_init(ks[0], ks[1], IN, HIDDEN)
    wb, bb = linear_init(ks[2], ks[3], HIDDEN, HIDDEN)
    w2, b2 = linear_init(ks[4], ks[5], HIDDEN, OUT)

    gamma = jnp.ones((1, HIDDEN), jnp.float32)
    beta = jnp.zeros((1, HIDDEN), jnp.float32)
    mean = jnp.zeros((1, HIDDEN), jnp.float32)
    var = jnp.ones((1, HIDDEN), jnp.float32)

    return (w1, b1, wb, bb, gamma, beta, mean, var, w2, b2)


def reference(x, params):
    w1, b1, wb, bb, gamma, beta, mean, var, w2, b2 = params
    h = x @ w1 + b1
    for _ in range(2):
        h = jax.nn.sigmoid(h)
        h = h @ wb + bb
    h = (h - mean) / jnp.sqrt(var + BN_EPS) * gamma + beta
    h = jax.nn.sigmoid(h)
    logits = h @ w2 + b2
    return jax.nn.softmax(logits, axis=-1)


if __name__ == "__main__":
    key = jax.random.PRNGKey(0)
    kx, kp = jax.random.split(key)

    B = 8
    x = jax.random.normal(kx, (B, IN), jnp.float32)
    params = init_params(kp)

    out = regression_model(x, params)
    out = jax.block_until_ready(out)

    ref = reference(x, params)
    assert out.shape == (B, OUT)
    assert jnp.allclose(out, ref, atol=1e-5, rtol=1e-5), (out, ref)
    assert jnp.allclose(jnp.sum(out, axis=-1), 1.0, atol=1e-5)

    print("KERNEL_OK")
</pallas_src>

<mosaic_0001>
module attributes {stable_mosaic.version = 11 : i64} {
  func.func @regression_kernel(%arg0: i32, %arg1: memref<8x1xf32, #tpu.memory_space<vmem>>, %arg2: memref<1x128xf32, #tpu.memory_space<vmem>>, %arg3: memref<128x128xf32, #tpu.memory_space<vmem>>, %arg4: memref<128x128xf32, #tpu.memory_space<vmem>>, %arg5: memref<8x128xf32, #tpu.memory_space<vmem>>, %arg6: memref<8x128xf32, #tpu.memory_space<vmem>>) attributes {dimension_semantics = [#tpu.dimension_semantics<parallel>], iteration_bounds = array<i64: 1>, scalar_prefetch = 0 : i64, scratch_operands = 0 : i64, tpu.core_type = #tpu.core_type<tc>, window_params = [{transform_indices = @transform_0, window_bounds = array<i64: 8, 1>}, {pipeline_mode = #tpu.pipeline_mode<synchronous>, transform_indices = @transform_1, window_bounds = array<i64: 1, 128>}, {pipeline_mode = #tpu.pipeline_mode<synchronous>, transform_indices = @transform_2, window_bounds = array<i64: 128, 128>}, {pipeline_mode = #tpu.pipeline_mode<synchronous>, transform_indices = @transform_3, window_bounds = array<i64: 128, 128>}, {pipeline_mode = #tpu.pipeline_mode<synchronous>, transform_indices = @transform_4, window_bounds = array<i64: 8, 128>}, {transform_indices = @transform_5, window_bounds = array<i64: 8, 128>}]} {
    %c0 = arith.constant 0 : index
    %c0_0 = arith.constant 0 : index
    %0 = vector.load %arg5[%c0, %c0_0] : memref<8x128xf32, #tpu.memory_space<vmem>>, vector<1x128xf32>
    %c1 = arith.constant 1 : index
    %c0_1 = arith.constant 0 : index
    %1 = vector.load %arg5[%c1, %c0_1] : memref<8x128xf32, #tpu.memory_space<vmem>>, vector<1x128xf32>
    %c2 = arith.constant 2 : index
    %c0_2 = arith.constant 0 : index
    %2 = vector.load %arg5[%c2, %c0_2] : memref<8x128xf32, #tpu.memory_space<vmem>>, vector<1x128xf32>
    %c3 = arith.constant 3 : index
    %c0_3 = arith.constant 0 : index
    %3 = vector.load %arg5[%c3, %c0_3] : memref<8x128xf32, #tpu.memory_space<vmem>>, vector<1x128xf32>
    %c4 = arith.constant 4 : index
    %c0_4 = arith.constant 0 : index
    %4 = vector.load %arg5[%c4, %c0_4] : memref<8x128xf32, #tpu.memory_space<vmem>>, vector<1x128xf32>
    %c0_5 = arith.constant 0 : index
    %c0_6 = arith.constant 0 : index
    %5 = vector.load %arg1[%c0_5, %c0_6] : memref<8x1xf32, #tpu.memory_space<vmem>>, vector<8x1xf32>
    %c0_7 = arith.constant 0 : index
    %c0_8 = arith.constant 0 : index
    %6 = vector.load %arg2[%c0_7, %c0_8] : memref<1x128xf32, #tpu.memory_space<vmem>>, vector<1x128xf32>
    %7 = vector.broadcast %5 : vector<8x1xf32> to vector<8x128xf32>
    %8 = vector.broadcast %6 : vector<1x128xf32> to vector<8x128xf32>
    %9 = arith.mulf %7, %8 : vector<8x128xf32>
    %10 = vector.broadcast %0 : vector<1x128xf32> to vector<8x128xf32>
    %11 = arith.addf %9, %10 : vector<8x128xf32>
    %c0_9 = arith.constant 0 : index
    %c0_10 = arith.constant 0 : index
    %12 = vector.load %arg3[%c0_9, %c0_10] : memref<128x128xf32, #tpu.memory_space<vmem>>, vector<128x128xf32>
    %cst = arith.constant 5.000000e-01 : f32
    %13 = vector.broadcast %cst : f32 to vector<8x128xf32>
    %14 = arith.mulf %13, %11 : vector<8x128xf32>
    %15 = math.tanh %14 : vector<8x128xf32>
    %cst_11 = arith.constant 5.000000e-01 : f32
    %16 = vector.broadcast %cst_11 : f32 to vector<8x128xf32>
    %17 = arith.mulf %16, %15 : vector<8x128xf32>
    %cst_12 = arith.constant 5.000000e-01 : f32
    %18 = vector.broadcast %cst_12 : f32 to vector<8x128xf32>
    %19 = arith.addf %17, %18 : vector<8x128xf32>
    %cst_13 = arith.constant dense<0.000000e+00> : vector<8x128xf32>
    %20 = tpu.matmul %19, %12, %cst_13 {dimension_numbers = #tpu.dot_dimension_numbers<[1], [0], [0], [1], [0, 0, 1, 1], [], []>} : vector<8x128xf32>, vector<128x128xf32>, vector<8x128xf32> -> vector<8x128xf32>
    %21 = vector.broadcast %1 : vector<1x128xf32> to vector<8x128xf32>
    %22 = arith.addf %20, %21 : vector<8x128xf32>
    %cst_14 = arith.constant 5.000000e-01 : f32
    %23 = vector.broadcast %cst_14 : f32 to vector<8x128xf32>
    %24 = arith.mulf %23, %22 : vector<8x128xf32>
    %25 = math.tanh %24 : vector<8x128xf32>
    %cst_15 = arith.constant 5.000000e-01 : f32
    %26 = vector.broadcast %cst_15 : f32 to vector<8x128xf32>
    %27 = arith.mulf %26, %25 : vector<8x128xf32>
    %cst_16 = arith.constant 5.000000e-01 : f32
    %28 = vector.broadcast %cst_16 : f32 to vector<8x128xf32>
    %29 = arith.addf %27, %28 : vector<8x128xf32>
    %cst_17 = arith.constant dense<0.000000e+00> : vector<8x128xf32>
    %30 = tpu.matmul %29, %12, %cst_17 {dimension_numbers = #tpu.dot_dimension_numbers<[1], [0], [0], [1], [0, 0, 1, 1], [], []>} : vector<8x128xf32>, vector<128x128xf32>, vector<8x128xf32> -> vector<8x128xf32>
    %31 = vector.broadcast %1 : vector<1x128xf32> to vector<8x128xf32>
    %32 = arith.addf %30, %31 : vector<8x128xf32>
    %33 = vector.broadcast %2 : vector<1x128xf32> to vector<8x128xf32>
    %34 = arith.mulf %32, %33 : vector<8x128xf32>
    %35 = vector.broadcast %3 : vector<1x128xf32> to vector<8x128xf32>
    %36 = arith.addf %34, %35 : vector<8x128xf32>
    %cst_18 = arith.constant 5.000000e-01 : f32
    %37 = vector.broadcast %cst_18 : f32 to vector<8x128xf32>
    %38 = arith.mulf %37, %36 : vector<8x128xf32>
    %39 = math.tanh %38 : vector<8x128xf32>
    %cst_19 = arith.constant 5.000000e-01 : f32
    %40 = vector.broadcast %cst_19 : f32 to vector<8x128xf32>
    %41 = arith.mulf %40, %39 : vector<8x128xf32>
    %cst_20 = arith.constant 5.000000e-01 : f32
    %42 = vector.broadcast %cst_20 : f32 to vector<8x128xf32>
    %43 = arith.addf %41, %42 : vector<8x128xf32>
    %c0_21 = arith.constant 0 : index
    %c0_22 = arith.constant 0 : index
    %44 = vector.load %arg4[%c0_21, %c0_22] : memref<128x128xf32, #tpu.memory_space<vmem>>, vector<128x128xf32>
    %cst_23 = arith.constant dense<0.000000e+00> : vector<8x128xf32>
    %45 = tpu.matmul %43, %44, %cst_23 {dimension_numbers = #tpu.dot_dimension_numbers<[1], [0], [0], [1], [0, 0, 1, 1], [], []>} : vector<8x128xf32>, vector<128x128xf32>, vector<8x128xf32> -> vector<8x128xf32>
    %46 = vector.broadcast %4 : vector<1x128xf32> to vector<8x128xf32>
    %47 = arith.addf %45, %46 : vector<8x128xf32>
    %cst_24 = arith.constant dense<0xFF800000> : vector<8xf32>
    %48 = vector.multi_reduction <maximumf>, %47, %cst_24 [1] : vector<8x128xf32> to vector<8xf32>
    %49 = vector.shape_cast %48 : vector<8xf32> to vector<8x1xf32>
    %50 = vector.broadcast %49 : vector<8x1xf32> to vector<8x128xf32>
    %51 = arith.subf %47, %50 : vector<8x128xf32>
    %52 = math.exp %51 : vector<8x128xf32>
    %cst_25 = arith.constant dense<0.000000e+00> : vector<8xf32>
    %53 = vector.multi_reduction <add>, %52, %cst_25 [1] : vector<8x128xf32> to vector<8xf32>
    %54 = vector.shape_cast %53 : vector<8xf32> to vector<8x1xf32>
    %55 = tpu.reciprocal %54 : vector<8x1xf32> -> vector<8x1xf32>
    %56 = vector.broadcast %55 : vector<8x1xf32> to vector<8x128xf32>
    %57 = arith.mulf %52, %56 : vector<8x128xf32>
    %c0_26 = arith.constant 0 : index
    %c0_27 = arith.constant 0 : index
    %58 = vector.load %arg6[%c0_26, %c0_27] : memref<8x128xf32, #tpu.memory_space<vmem>>, vector<8x128xf32>
    tpu.vector_store %arg6[%c0_26, %c0_27], %57 {strides = array<i32>} : memref<8x128xf32, #tpu.memory_space<vmem>>, vector<8x128xf32>,
    return
  }
  func.func @transform_0(%arg0: i32) -> (i32, i32) {
    %c0_i32 = arith.constant 0 : i32
    %c0_i32_0 = arith.constant 0 : i32
    return %arg0, %c0_i32 : i32, i32
  }
  func.func @transform_1(%arg0: i32) -> (i32, i32) {
    %c0_i32 = arith.constant 0 : i32
    %c0_i32_0 = arith.constant 0 : i32
    %c0_i32_1 = arith.constant 0 : i32
    return %c0_i32, %c0_i32_0 : i32, i32
  }
  func.func @transform_2(%arg0: i32) -> (i32, i32) {
    %c0_i32 = arith.constant 0 : i32
    %c0_i32_0 = arith.constant 0 : i32
    %c0_i32_1 = arith.constant 0 : i32
    return %c0_i32, %c0_i32_0 : i32, i32
  }
  func.func @transform_3(%arg0: i32) -> (i32, i32) {
    %c0_i32 = arith.constant 0 : i32
    %c0_i32_0 = arith.constant 0 : i32
    %c0_i32_1 = arith.constant 0 : i32
    return %c0_i32, %c0_i32_0 : i32, i32
  }
  func.func @transform_4(%arg0: i32) -> (i32, i32) {
    %c0_i32 = arith.constant 0 : i32
    %c0_i32_0 = arith.constant 0 : i32
    %c0_i32_1 = arith.constant 0 : i32
    return %c0_i32, %c0_i32_0 : i32, i32
  }
  func.func @transform_5(%arg0: i32) -> (i32, i32) {
    %c0_i32 = arith.constant 0 : i32
    %c0_i32_0 = arith.constant 0 : i32
    return %arg0, %c0_i32 : i32, i32
  }
}

</mosaic_0001>

<llo_original>
// kernel: tpu_custom_call.1
$region0: #{tpu_custom_call.1}
  #allocation0 [shape = 'u32[]', space=smem, size = 0x4, offset = 0x4, fixed_abs, tag = 'smem constant byte address 0x4 - core index']
  #allocation1 [shape = 'u32[144,128]{1,0:T(1,128)}', space=vmem, size = 0x12000, scoped, tag = 'internal scratch']
  %s0 = inlined_call_operand.vmem [shape: f32[8,1], index: 0, kind: input, shape index: {}]
  %s1 = inlined_call_operand.vmem [shape: f32[1,128], index: 1, kind: input, shape index: {}]
  %s2 = inlined_call_operand.hbm [shape: f32[128,128], index: 2, kind: input, shape index: {}]
  %s3 = inlined_call_operand.hbm [shape: f32[128,128], index: 3, kind: input, shape index: {}]
  %s4 = inlined_call_operand.vmem [shape: f32[8,128], index: 4, kind: input, shape index: {}]
  %s5 = inlined_call_operand.hbm [shape: f32[8,128], index: 5, kind: output, shape index: {}]
  %s6 = sld [smem:[#allocation0]]
  $region38: #{tpu_custom_call.1} parent=0
    _
  %s8 = ssub.s32 1, %s6
  %s9 = scalar_select 0, %s8, %s6
  $region1: #{tpu_custom_call.1} parent=0
    #allocation2 [shape = 'u8[65536]{0}', space=vmem, size = 0x10000, scoped, tag = 'input window, operand 2, single buffered']
    #allocation3 [shape = 's32[1]{0}', space=sflag, size = 0x4, scoped, tag = 'scoped memory for tpu_custom_call.1']
    #allocation4 [shape = 's32[1]{0}', space=sflag, size = 0x4, scoped, tag = 'scoped memory for tpu_custom_call.1']
    #allocation5 [shape = 'u8[65536]{0}', space=vmem, size = 0x10000, scoped, tag = 'input window, operand 3, single buffered']
    #allocation6 [shape = 's32[1]{0}', space=sflag, size = 0x4, scoped, tag = 'scoped memory for tpu_custom_call.1']
    #allocation7 [shape = 'u8[4096]{0}', space=vmem, size = 0x1000, scoped, tag = 'output window, operand 0, single buffered']
    %10 = vsyncpa [#allocation3], 0
    %11 = vsyncpa [#allocation6], 0
    %12 = vsyncpa [#allocation4], 0
    // Predicated region
    $region2: #{tpu_custom_call.1} parent=1 // pred_check
      _
    $region3: #{tpu_custom_call.1} parent=1 // pred_check_branch
      %14 = sbr.rel (0) target = $region5
    $region4: #{tpu_custom_call.1} parent=1 // pred_region
      _
    $region5: #{tpu_custom_call.1} parent=1 // pred_fallthru
      _
    // Predicated region
    $region6: #{tpu_custom_call.1} parent=1 // pred_check
      _
    $region7: #{tpu_custom_call.1} parent=1 // pred_check_branch
      %16 = sbr.rel (0) target = $region9
    $region8: #{tpu_custom_call.1} parent=1 // pred_region
      _
    $region9: #{tpu_custom_call.1} parent=1 // pred_fallthru
      _
    // Predicated region
    $region10: #{tpu_custom_call.1} parent=1 // pred_check
      _
    $region11: #{tpu_custom_call.1} parent=1 // pred_check_branch
      %18 = sbr.rel (0) target = $region13
    $region12: #{tpu_custom_call.1} parent=1 // pred_region
      %s20 = ssub.s32 2048, 2048
      %21 = vsyncadd [#allocation3], %s20
      %s22 = sshll.u32 [#allocation2], 4
      %s23 = int_to_ptr.vmem [resolvable:$true] %s22
      %28 = dma.hbm_to_vmem [thread:$0]  %s2, 2048, %s23, [#allocation3], 128, 128, 8
    $region13: #{tpu_custom_call.1} parent=1 // pred_fallthru
      _
    // Predicated region
    $region14: #{tpu_custom_call.1} parent=1 // pred_check
      _
    $region15: #{tpu_custom_call.1} parent=1 // pred_check_branch
      %30 = sbr.rel (0) target = $region17
    $region16: #{tpu_custom_call.1} parent=1 // pred_region
      %s32 = ssub.s32 2048, 2048
      %33 = vsyncadd [#allocation6], %s32
      %s34 = sshll.u32 [#allocation5], 4
      %s35 = int_to_ptr.vmem [resolvable:$true] %s34
      %40 = dma.hbm_to_vmem [thread:$0]  %s3, 2048, %s35, [#allocation6], 128, 128, 8
    $region17: #{tpu_custom_call.1} parent=1 // pred_fallthru
      _
    // Predicated region
    $region18: #{tpu_custom_call.1} parent=1 // pred_check
      _
    $region19: #{tpu_custom_call.1} parent=1 // pred_check_branch
      %42 = sbr.rel (0) target = $region21
    $region20: #{tpu_custom_call.1} parent=1 // pred_region
      _
    $region21: #{tpu_custom_call.1} parent=1 // pred_fallthru
      _
    // Predicated region
    $region22: #{tpu_custom_call.1} parent=1 // pred_check
      _
    $region23: #{tpu_custom_call.1} parent=1 // pred_check_branch
      %44 = sbr.rel (0) target = $region25
    $region24: #{tpu_custom_call.1} parent=1 // pred_region
      %45 = dma.done [#allocation3], 2048
    $region25: #{tpu_custom_call.1} parent=1 // pred_fallthru
      _
    // Predicated region
    $region26: #{tpu_custom_call.1} parent=1 // pred_check
      _
    $region27: #{tpu_custom_call.1} parent=1 // pred_check_branch
      %47 = sbr.rel (0) target = $region29
    $region28: #{tpu_custom_call.1} parent=1 // pred_region
      %48 = dma.done [#allocation6], 2048
    $region29: #{tpu_custom_call.1} parent=1 // pred_fallthru
      _
    %v49 = vld [vmem:[%s4] sm:$0x1]
    %v50 = vld [vmem:[%s4 + $0x1] sm:$0x1]
    %v51 = vld [vmem:[%s4 + $0x2] sm:$0x1]
    %v52 = vld [vmem:[%s4 + $0x3] sm:$0x1]
    %v53 = vld [vmem:[%s4 + $0x4] sm:$0x1]
    %v54 = vld [vmem:[%s0] sm:$0xff]
    %v55 = vld [vmem:[%s1] sm:$0x1]
    %57 = vset.pattern.permute.xlu0 0
    %58 = vperm.xlu0 %57, %v54
    %v59 = vpop.permute.xlu0 %58
    %v62 = vlaneseq
    %v63 = vshrl.u32 %v62, 7
    %v64 = vsub.s32 0, %v63
    %v65 = vrot.slane %v55, %v64
    %v67 = vmul.f32 %v59, %v65
    %v68 = vlaneseq
    %v69 = vshrl.u32 %v68, 7
    %v70 = vsub.s32 0, %v69
    %v71 = vrot.slane %v49, %v70
    %v72 = vadd.f32 %v67, %v71
    %v73 = vld [vmem:[#allocation2] sm:$0xff]
    %v74 = vld [vmem:[#allocation2 + $0x8] sm:$0xff]
    %v75 = vld [vmem:[#allocation2 + $0x10] sm:$0xff]
    %v76 = vld [vmem:[#allocation2 + $0x18] sm:$0xff]
    %v77 = vld [vmem:[#allocation2 + $0x20] sm:$0xff]
    %v78 = vld [vmem:[#allocation2 + $0x28] sm:$0xff]
    %v79 = vld [vmem:[#allocation2 + $0x30] sm:$0xff]
    %v80 = vld [vmem:[#allocation2 + $0x38] sm:$0xff]
    %v81 = vld [vmem:[#allocation2 + $0x40] sm:$0xff]
    %v82 = vld [vmem:[#allocation2 + $0x48] sm:$0xff]
    %v83 = vld [vmem:[#allocation2 + $0x50] sm:$0xff]
    %v84 = vld [vmem:[#allocation2 + $0x58] sm:$0xff]
    %v85 = vld [vmem:[#allocation2 + $0x60] sm:$0xff]
    %v86 = vld [vmem:[#allocation2 + $0x68] sm:$0xff]
    %v87 = vld [vmem:[#allocation2 + $0x70] sm:$0xff]
    %v88 = vld [vmem:[#allocation2 + $0x78] sm:$0xff]
    %v89 = vmul.f32 %v72, 0.5
    %v90 = vtanh.pop %v89
    %v91 = vmul.f32 %v90, 0.5
    %v92 = vadd.f32 %v91, 0.5
    %v93 = vlaneseq
    %v94 = vshrl.u32 %v93, 7
    %v95 = vsub.s32 0, %v94
    %v96 = vrot.slane %v50, %v95
    %97 = vmatprep.subr.mxu0 0.0
    %98 = vmatpush1.msra.mxu0 %v73
    %99 = vmatprep.subr.mxu0 0.0
    %100 = vmatpush1.msra.mxu0 %v74
    %101 = vmatprep.subr.mxu0 0.0
    %102 = vmatpush1.msra.mxu0 %v75
    %103 = vmatprep.subr.mxu0 0.0
    %104 = vmatpush1.msra.mxu0 %v76
    %105 = vmatprep.subr.mxu0 0.0
    %106 = vmatpush1.msra.mxu0 %v77
    %107 = vmatprep.subr.mxu0 0.0
    %108 = vmatpush1.msra.mxu0 %v78
    %109 = vmatprep.subr.mxu0 0.0
    %110 = vmatpush1.msra.mxu0 %v79
    %111 = vmatprep.subr.mxu0 0.0
    %112 = vmatpush1.msra.mxu0 %v80
    %113 = vmatprep.subr.mxu0 0.0
    %114 = vmatpush1.msra.mxu0 %v81
    %115 = vmatprep.subr.mxu0 0.0
    %116 = vmatpush1.msra.mxu0 %v82
    %117 = vmatprep.subr.mxu0 0.0
    %118 = vmatpush1.msra.mxu0 %v83
    %119 = vmatprep.subr.mxu0 0.0
    %120 = vmatpush1.msra.mxu0 %v84
    %121 = vmatprep.subr.mxu0 0.0
    %122 = vmatpush1.msra.mxu0 %v85
    %123 = vmatprep.subr.mxu0 0.0
    %124 = vmatpush1.msra.mxu0 %v86
    %125 = vmatprep.subr.mxu0 0.0
    %126 = vmatpush1.msra.mxu0 %v87
    %127 = vmatprep.subr.mxu0 0.0
    %128 = vmatpush1.msra.mxu0 %v88
    %129 = vmatprep.subr.mxu0 0.0
    %130 = vmatpush1.msra.mxu0 0.0
    %131 = vmatprep.subr.mxu0 0.0
    %132 = vmatpush1.msra.mxu0 0.0
    %133 = vmatprep.subr.mxu0 0.0
    %134 = vmatpush1.msra.mxu0 0.0
    %135 = vmatprep.subr.mxu0 0.0
    %136 = vmatpush1.msra.mxu0 0.0
    %137 = vmatprep.subr.mxu0 0.0
    %138 = vmatpush1.msra.mxu0 0.0
    %139 = vmatprep.subr.mxu0 0.0
    %140 = vmatpush1.msra.mxu0 0.0
    %141 = vmatprep.subr.mxu0 0.0
    %142 = vmatpush1.msra.mxu0 0.0
    %143 = vmatprep.subr.mxu0 0.0
    %144 = vmatpush1.msra.mxu0 0.0
    %145 = vmatprep.subr.mxu0 0.0
    %146 = vmatpush1.msra.mxu0 0.0
    %147 = vmatprep.subr.mxu0 0.0
    %148 = vmatpush1.msra.mxu0 0.0
    %149 = vmatprep.subr.mxu0 0.0
    %150 = vmatpush1.msra.mxu0 0.0
    %151 = vmatprep.subr.mxu0 0.0
    %152 = vmatpush1.msra.mxu0 0.0
    %153 = vmatprep.subr.mxu0 0.0
    %154 = vmatpush1.msra.mxu0 0.0
    %155 = vmatprep.subr.mxu0 0.0
    %156 = vmatpush1.msra.mxu0 0.0
    %157 = vmatprep.subr.mxu0 0.0
    %158 = vmatpush1.msra.mxu0 0.0
    %159 = vmatprep.subr.mxu0 0.0
    %160 = vmatpush1.msra.mxu0 0.0
    %161 = vmatprep.mubr.f32.mxu0 0.0
    %162 = vmatmul.mubr.f32.gmra.mrb[0].mxu0 %v92
    %v163 = vpop.f32.mrb[0].mxu0
    %v164 = vadd.f32 %v96, %v163
    %v165 = vpop.f32.mrb[0].mxu0
    %166 = vdwg.mxu0
    %v167 = vmul.f32 %v164, 0.5
    %v168 = vtanh.pop %v167
    %v169 = vmul.f32 %v168, 0.5
    %v170 = vadd.f32 %v169, 0.5
    %171 = vmatprep.subr.mxu0 0.0
    %172 = vmatpush1.msra.mxu0 %v73
    %173 = vmatprep.subr.mxu0 0.0
    %174 = vmatpush1.msra.mxu0 %v74
    %175 = vmatprep.subr.mxu0 0.0
    %176 = vmatpush1.msra.mxu0 %v75
    %177 = vmatprep.subr.mxu0 0.0
    %178 = vmatpush1.msra.mxu0 %v76
    %179 = vmatprep.subr.mxu0 0.0
    %180 = vmatpush1.msra.mxu0 %v77
    %181 = vmatprep.subr.mxu0 0.0
    %182 = vmatpush1.msra.mxu0 %v78
    %183 = vmatprep.subr.mxu0 0.0
    %184 = vmatpush1.msra.mxu0 %v79
    %185 = vmatprep.subr.mxu0 0.0
    %186 = vmatpush1.msra.mxu0 %v80
    %187 = vmatprep.subr.mxu0 0.0
    %188 = vmatpush1.msra.mxu0 %v81
    %189 = vmatprep.subr.mxu0 0.0
    %190 = vmatpush1.msra.mxu0 %v82
    %191 = vmatprep.subr.mxu0 0.0
    %192 = vmatpush1.msra.mxu0 %v83
    %193 = vmatprep.subr.mxu0 0.0
    %194 = vmatpush1.msra.mxu0 %v84
    %195 = vmatprep.subr.mxu0 0.0
    %196 = vmatpush1.msra.mxu0 %v85
    %197 = vmatprep.subr.mxu0 0.0
    %198 = vmatpush1.msra.mxu0 %v86
    %199 = vmatprep.subr.mxu0 0.0
    %200 = vmatpush1.msra.mxu0 %v87
    %201 = vmatprep.subr.mxu0 0.0
    %202 = vmatpush1.msra.mxu0 %v88
    %203 = vmatprep.subr.mxu0 0.0
    %204 = vmatpush1.msra.mxu0 0.0
    %205 = vmatprep.subr.mxu0 0.0
    %206 = vmatpush1.msra.mxu0 0.0
    %207 = vmatprep.subr.mxu0 0.0
    %208 = vmatpush1.msra.mxu0 0.0
    %209 = vmatprep.subr.mxu0 0.0
    %210 = vmatpush1.msra.mxu0 0.0
    %211 = vmatprep.subr.mxu0 0.0
    %212 = vmatpush1.msra.mxu0 0.0
    %213 = vmatprep.subr.mxu0 0.0
    %214 = vmatpush1.msra.mxu0 0.0
    %215 = vmatprep.subr.mxu0 0.0
    %216 = vmatpush1.msra.mxu0 0.0
    %217 = vmatprep.subr.mxu0 0.0
    %218 = vmatpush1.msra.mxu0 0.0
    %219 = vmatprep.subr.mxu0 0.0
    %220 = vmatpush1.msra.mxu0 0.0
    %221 = vmatprep.subr.mxu0 0.0
    %222 = vmatpush1.msra.mxu0 0.0
    %223 = vmatprep.subr.mxu0 0.0
    %224 = vmatpush1.msra.mxu0 0.0
    %225 = vmatprep.subr.mxu0 0.0
    %226 = vmatpush1.msra.mxu0 0.0
    %227 = vmatprep.subr.mxu0 0.0
    %228 = vmatpush1.msra.mxu0 0.0
    %229 = vmatprep.subr.mxu0 0.0
    %230 = vmatpush1.msra.mxu0 0.0
    %231 = vmatprep.subr.mxu0 0.0
    %232 = vmatpush1.msra.mxu0 0.0
    %233 = vmatprep.subr.mxu0 0.0
    %234 = vmatpush1.msra.mxu0 0.0
    %235 = vmatprep.mubr.f32.mxu0 0.0
    %236 = vmatmul.mubr.f32.gmra.mrb[0].mxu0 %v170
    %v237 = vpop.f32.mrb[0].mxu0
    %v238 = vadd.f32 %v96, %v237
    %v239 = vpop.f32.mrb[0].mxu0
    %240 = vdwg.mxu0
    %v241 = vlaneseq
    %v242 = vshrl.u32 %v241, 7
    %v243 = vsub.s32 0, %v242
    %v244 = vrot.slane %v51, %v243
    %v245 = vmul.f32 %v238, %v244
    %v246 = vlaneseq
    %v247 = vshrl.u32 %v246, 7
    %v248 = vsub.s32 0, %v247
    %v249 = vrot.slane %v52, %v248
    %v250 = vadd.f32 %v245, %v249
    %v251 = vmul.f32 %v250, 0.5
    %v252 = vtanh.pop %v251
    %v253 = vmul.f32 %v252, 0.5
    %v254 = vadd.f32 %v253, 0.5
    %v255 = vld [vmem:[#allocation5] sm:$0xff]
    %v256 = vld [vmem:[#allocation5 + $0x8] sm:$0xff]
    %v257 = vld [vmem:[#allocation5 + $0x10] sm:$0xff]
    %v258 = vld [vmem:[#allocation5 + $0x18] sm:$0xff]
    %v259 = vld [vmem:[#allocation5 + $0x20] sm:$0xff]
    %v260 = vld [vmem:[#allocation5 + $0x28] sm:$0xff]
    %v261 = vld [vmem:[#allocation5 + $0x30] sm:$0xff]
    %v262 = vld [vmem:[#allocation5 + $0x38] sm:$0xff]
    %v263 = vld [vmem:[#allocation5 + $0x40] sm:$0xff]
    %v264 = vld [vmem:[#allocation5 + $0x48] sm:$0xff]
    %v265 = vld [vmem:[#allocation5 + $0x50] sm:$0xff]
    %v266 = vld [vmem:[#allocation5 + $0x58] sm:$0xff]
    %v267 = vld [vmem:[#allocation5 + $0x60] sm:$0xff]
    %v268 = vld [vmem:[#allocation5 + $0x68] sm:$0xff]
    %v269 = vld [vmem:[#allocation5 + $0x70] sm:$0xff]
    %v270 = vld [vmem:[#allocation5 + $0x78] sm:$0xff]
    %v271 = vlaneseq
    %v272 = vshrl.u32 %v271, 7
    %v273 = vsub.s32 0, %v272
    %v274 = vrot.slane %v53, %v273
    %275 = vmatprep.subr.mxu0 0.0
    %276 = vmatpush1.msra.mxu0 %v255
    %277 = vmatprep.subr.mxu0 0.0
    %278 = vmatpush1.msra.mxu0 %v256
    %279 = vmatprep.subr.mxu0 0.0
    %280 = vmatpush1.msra.mxu0 %v257
    %281 = vmatprep.subr.mxu0 0.0
    %282 = vmatpush1.msra.mxu0 %v258
    %283 = vmatprep.subr.mxu0 0.0
    %284 = vmatpush1.msra.mxu0 %v259
    %285 = vmatprep.subr.mxu0 0.0
    %286 = vmatpush1.msra.mxu0 %v260
    %287 = vmatprep.subr.mxu0 0.0
    %288 = vmatpush1.msra.mxu0 %v261
    %289 = vmatprep.subr.mxu0 0.0
    %290 = vmatpush1.msra.mxu0 %v262
    %291 = vmatprep.subr.mxu0 0.0
    %292 = vmatpush1.msra.mxu0 %v263
    %293 = vmatprep.subr.mxu0 0.0
    %294 = vmatpush1.msra.mxu0 %v264
    %295 = vmatprep.subr.mxu0 0.0
    %296 = vmatpush1.msra.mxu0 %v265
    %297 = vmatprep.subr.mxu0 0.0
    %298 = vmatpush1.msra.mxu0 %v266
    %299 = vmatprep.subr.mxu0 0.0
    %300 = vmatpush1.msra.mxu0 %v267
    %301 = vmatprep.subr.mxu0 0.0
    %302 = vmatpush1.msra.mxu0 %v268
    %303 = vmatprep.subr.mxu0 0.0
    %304 = vmatpush1.msra.mxu0 %v269
    %305 = vmatprep.subr.mxu0 0.0
    %306 = vmatpush1.msra.mxu0 %v270
    %307 = vmatprep.subr.mxu0 0.0
    %308 = vmatpush1.msra.mxu0 0.0
    %309 = vmatprep.subr.mxu0 0.0
    %310 = vmatpush1.msra.mxu0 0.0
    %311 = vmatprep.subr.mxu0 0.0
    %312 = vmatpush1.msra.mxu0 0.0
    %313 = vmatprep.subr.mxu0 0.0
    %314 = vmatpush1.msra.mxu0 0.0
    %315 = vmatprep.subr.mxu0 0.0
    %316 = vmatpush1.msra.mxu0 0.0
    %317 = vmatprep.subr.mxu0 0.0
    %318 = vmatpush1.msra.mxu0 0.0
    %319 = vmatprep.subr.mxu0 0.0
    %320 = vmatpush1.msra.mxu0 0.0
    %321 = vmatprep.subr.mxu0 0.0
    %322 = vmatpush1.msra.mxu0 0.0
    %323 = vmatprep.subr.mxu0 0.0
    %324 = vmatpush1.msra.mxu0 0.0
    %325 = vmatprep.subr.mxu0 0.0
    %326 = vmatpush1.msra.mxu0 0.0
    %327 = vmatprep.subr.mxu0 0.0
    %328 = vmatpush1.msra.mxu0 0.0
    %329 = vmatprep.subr.mxu0 0.0
    %330 = vmatpush1.msra.mxu0 0.0
    %331 = vmatprep.subr.mxu0 0.0
    %332 = vmatpush1.msra.mxu0 0.0
    %333 = vmatprep.subr.mxu0 0.0
    %334 = vmatpush1.msra.mxu0 0.0
    %335 = vmatprep.subr.mxu0 0.0
    %336 = vmatpush1.msra.mxu0 0.0
    %337 = vmatprep.subr.mxu0 0.0
    %338 = vmatpush1.msra.mxu0 0.0
    %339 = vmatprep.mubr.f32.mxu0 0.0
    %340 = vmatmul.mubr.f32.gmra.mrb[0].mxu0 %v254
    %v341 = vpop.f32.mrb[0].mxu0
    %v342 = vadd.f32 %v274, %v341
    %v343 = vpop.f32.mrb[0].mxu0
    %344 = vdwg.mxu0
    %345 = vmax.xlane.f32.xlu0 %v342
    %v346 = vpop.xlane.xlu0 %345
    %v347 = vsub.f32 %v342, %v346
    %v348 = vmul.f32 %v347, 1.442695
    %v349 = vpow.pop %v348
    %350 = vadd.xlane.f32.xlu0 %v349
    %v351 = vpop.xlane.xlu0 %350
    %v352 = vrcp.pop %v351
    %v353 = vmul.f32 %v349, %v352
    %354 = vst [vmem:[#allocation7] sm:$0xff] %v353
    // Predicated region
    $region30: #{tpu_custom_call.1} parent=1 // pred_check
      _
    $region31: #{tpu_custom_call.1} parent=1 // pred_check_branch
      %356 = sbr.rel (0) target = $region33
    $region32: #{tpu_custom_call.1} parent=1 // pred_region
      %s358 = ssub.s32 128, 128
      %359 = vsyncadd [#allocation4], %s358
      %s361 = sshll.u32 [#allocation7], 4
      %s362 = int_to_ptr.vmem [resolvable:$true] %s361
      %364 = dma.vmem_to_hbm [thread:$0]  %s362, 128, %s5, [#allocation4]
    $region33: #{tpu_custom_call.1} parent=1 // pred_fallthru
      _
    // Predicated region
    $region34: #{tpu_custom_call.1} parent=1 // pred_check
      _
    $region35: #{tpu_custom_call.1} parent=1 // pred_check_branch
      %366 = sbr.rel (0) target = $region37
    $region36: #{tpu_custom_call.1} parent=1 // pred_region
      %367 = dma.done [#allocation4], 128
    $region37: #{tpu_custom_call.1} parent=1 // pred_fallthru
      _
    %368 = vsyncpa [#allocation3], 1
    %369 = vsyncpa [#allocation6], 1
    %370 = vsyncpa [#allocation4], 1

</llo_original>
